<compile_context>
chip_gen: v7x
topology: tpu7x:2x2x1
jax: 0.10.0
libtpu: 0.0.40
codegen_flags: <defaults>
</compile_context>

<pallas_src>
import functools

import jax
import jax.numpy as jnp
from jax.experimental import pallas as pl
from jax.experimental.pallas import tpu as pltpu


def _round_up(x, m):
    return (x + m - 1) // m * m


def _make_ctloss_kernel(n_rows, tn, n_blocks, steps_per_core, weight2):
    def kernel(y1_ref, y2_ref, d1_ref, d2_ref, o_ref, acc_ref):
        core = pl.program_id(0)
        step = pl.program_id(1)
        blk = core * steps_per_core + step          # logical row-block id

        @pl.when(step == 0)
        def _():
            acc_ref[...] = jnp.zeros_like(acc_ref)

        # Row validity: rows past the true batch size (partial last block) and
        # duplicate blocks (clamped index_map when n_blocks % num_cores != 0).
        row = jax.lax.broadcasted_iota(jnp.int32, (tn, 1), 0) + blk * tn
        valid = jnp.logical_and(row < n_rows, blk < n_blocks)       # (tn, 1)

        def ce_rows(y_ref, t_ref):
            y = y_ref[...].astype(jnp.float32)                      # (tn, C)
            # Mask garbage rows BEFORE max/exp so Inf/NaN can't leak in.
            y = jnp.where(valid, y, 0.0)
            c = y.shape[-1]
            col = jax.lax.broadcasted_iota(jnp.int32, (tn, c), 1)
            m = jnp.max(y, axis=-1, keepdims=True)
            lse = m + jnp.log(jnp.sum(jnp.exp(y - m), axis=-1, keepdims=True))
            tgt = t_ref[...]                                        # (tn, 1)
            tlogit = jnp.sum(jnp.where(col == tgt, y, 0.0),
                             axis=-1, keepdims=True)
            return jnp.where(valid, lse - tlogit, 0.0)              # (tn, 1)

        acc_ref[...] += (ce_rows(y1_ref, d1_ref)
                         + weight2 * ce_rows(y2_ref, d2_ref))

        @pl.when(step == steps_per_core - 1)
        def _():
            total = jnp.sum(acc_ref[...], axis=0, keepdims=True)    # (1, 1)
            # Splat the per-core partial across one vreg (lane-dense store).
            o_ref[...] = jnp.broadcast_to(total[None], o_ref.shape)

    return kernel


@functools.partial(jax.jit, static_argnames=("block_n",))
def ctloss_pallas(y1, y2, d, *, block_n=512):
    """y1: (N, C1) logits, y2: (N, C2) logits, d: (N, 2) int labels.
    Returns scalar: sum-CE(y1, d[:,0]) + 0.1 * sum-CE(y2, d[:,1])."""
    n, c1 = y1.shape
    _, c2 = y2.shape

    # Rows per grid step: large for the HBM roofline, capped so the
    # double-buffered input tiles fit a conservative VMEM budget.
    vmem_input_budget = 24 * 1024 * 1024        # bytes, double-buffered inputs
    bytes_per_row = 4 * (c1 + c2 + 2)
    cap = max(8, (vmem_input_budget // (2 * bytes_per_row)) // 8 * 8)
    tn = max(8, min(min(block_n, _round_up(n, 8)), cap))

    n_blocks = -(-n // tn)
    num_cores = 2 if n_blocks >= 2 else 1       # megacore split (neutral 1-TC)
    steps_per_core = -(-n_blocks // num_cores)

    d1 = d[:, 0:1].astype(jnp.int32)
    d2 = d[:, 1:2].astype(jnp.int32)

    def row_map(core, step):
        # Clamp so no block DMA starts past the array; the clamped duplicate
        # block is fully masked inside the kernel via `blk < n_blocks`.
        return (jnp.minimum(core * steps_per_core + step, n_blocks - 1), 0)

    kernel = _make_ctloss_kernel(n, tn, n_blocks, steps_per_core, 0.1)

    cost = pl.CostEstimate(
        flops=6 * n * (c1 + c2),
        transcendentals=n * (c1 + c2) + 2 * n,
        bytes_accessed=4 * (n * (c1 + c2) + 2 * n + num_cores * 8 * 128),
    )

    out = pl.pallas_call(
        kernel,
        out_shape=jax.ShapeDtypeStruct((num_cores, 8, 128), jnp.float32),
        grid=(num_cores, steps_per_core),
        in_specs=[
            pl.BlockSpec((tn, c1), row_map),    # full class dim: no padding
            pl.BlockSpec((tn, c2), row_map),
            pl.BlockSpec((tn, 1), row_map),
            pl.BlockSpec((tn, 1), row_map),
        ],
        out_specs=pl.BlockSpec((1, 8, 128), lambda core, step: (core, 0, 0)),
        scratch_shapes=[pltpu.VMEM((tn, 1), jnp.float32)],
        compiler_params=pltpu.CompilerParams(
            dimension_semantics=("parallel", "arbitrary"),
            vmem_limit_bytes=32 * 1024 * 1024,
        ),
        cost_estimate=cost,
    )(y1, y2, d1, d2)

    return out[:, 0, 0].sum()


def ctloss_reference(y1, y2, d):
    """Pure-JAX reference matching torch CrossEntropyLoss(reduction='sum')."""
    def ce_sum(y, t):
        lse = jax.scipy.special.logsumexp(y.astype(jnp.float32), axis=-1)
        tl = jnp.take_along_axis(y.astype(jnp.float32), t[:, None], axis=-1)[:, 0]
        return jnp.sum(lse - tl)
    return ce_sum(y1, d[:, 0]) + 0.1 * ce_sum(y2, d[:, 1])


if __name__ == "__main__":
    key = jax.random.PRNGKey(0)
    k1, k2, k3, k4 = jax.random.split(key, 4)

    # small shapes implied by the module: two logit heads + (N, 2) targets
    N, C1, C2 = 16, 8, 8
    y1 = jax.random.normal(k1, (N, C1), jnp.float32) * 2.0
    y2 = jax.random.normal(k2, (N, C2), jnp.float32) * 2.0
    d = jnp.stack(
        [jax.random.randint(k3, (N,), 0, C1),
         jax.random.randint(k4, (N,), 0, C2)], axis=1).astype(jnp.int32)

    loss = ctloss_pallas(y1, y2, d)
    loss = jax.block_until_ready(loss)

    ref = ctloss_reference(y1, y2, d)
    assert jnp.allclose(loss, ref, atol=1e-4, rtol=1e-4), (loss, ref)

    print("KERNEL_OK")
</pallas_src>

<mosaic_0001>
module attributes {stable_mosaic.version = 11 : i64} {
  func.func @kernel(%arg0: i32, %arg1: i32, %arg2: memref<16x8xf32, #tpu.memory_space<vmem>>, %arg3: memref<16x8xf32, #tpu.memory_space<vmem>>, %arg4: memref<16x1xi32, #tpu.memory_space<vmem>>, %arg5: memref<16x1xi32, #tpu.memory_space<vmem>>, %arg6: memref<1x8x128xf32, #tpu.memory_space<vmem>>, %arg7: memref<16x1xf32, #tpu.memory_space<vmem>>) attributes {dimension_semantics = [#tpu.dimension_semantics<parallel>, #tpu.dimension_semantics<arbitrary>], iteration_bounds = array<i64: 1, 1>, scalar_prefetch = 0 : i64, scratch_operands = 1 : i64, tpu.core_type = #tpu.core_type<tc>, window_params = [{transform_indices = @transform_0, window_bounds = array<i64: 16, 8>}, {transform_indices = @transform_1, window_bounds = array<i64: 16, 8>}, {transform_indices = @transform_2, window_bounds = array<i64: 16, 1>}, {transform_indices = @transform_3, window_bounds = array<i64: 16, 1>}, {transform_indices = @transform_4, window_bounds = array<i64: 1, 8, 128>}]} {
    %c1_i32 = arith.constant 1 : i32
    %0 = arith.muli %arg0, %c1_i32 : i32
    %1 = arith.addi %0, %arg1 : i32
    %c0_i32 = arith.constant 0 : i32
    %2 = arith.cmpi eq, %arg1, %c0_i32 : i32
    %3 = arith.extui %2 : i1 to i32
    %c0_i32_0 = arith.constant 0 : i32
    %4 = arith.cmpi ne, %3, %c0_i32_0 : i32
    scf.if %4 {
      %cst_28 = arith.constant 0.000000e+00 : f32
      %73 = vector.broadcast %cst_28 : f32 to vector<16x1xf32>
      %c0_29 = arith.constant 0 : index
      %c0_30 = arith.constant 0 : index
      %74 = vector.load %arg7[%c0_29, %c0_30] : memref<16x1xf32, #tpu.memory_space<vmem>>, vector<16x1xf32>
      tpu.vector_store %arg7[%c0_29, %c0_30], %73 {strides = array<i32>} : memref<16x1xf32, #tpu.memory_space<vmem>>, vector<16x1xf32>,
    } else {
    }
    %5 = tpu.iota {dimensions = array<i32: 0>} : vector<16x1xi32>
    %c16_i32 = arith.constant 16 : i32
    %6 = arith.muli %1, %c16_i32 : i32
    %7 = vector.broadcast %6 : i32 to vector<16x1xi32>
    %8 = arith.addi %5, %7 : vector<16x1xi32>
    %c16_i32_1 = arith.constant 16 : i32
    %9 = vector.broadcast %c16_i32_1 : i32 to vector<16x1xi32>
    %10 = arith.cmpi slt, %8, %9 : vector<16x1xi32>
    %c1_i32_2 = arith.constant 1 : i32
    %11 = arith.cmpi slt, %1, %c1_i32_2 : i32
    %12 = vector.broadcast %11 : i1 to vector<16x1xi1>
    %13 = arith.andi %10, %12 : vector<16x1xi1>
    %c0 = arith.constant 0 : index
    %c0_3 = arith.constant 0 : index
    %14 = vector.load %arg7[%c0, %c0_3] : memref<16x1xf32, #tpu.memory_space<vmem>>, vector<16x1xf32>
    %c0_4 = arith.constant 0 : index
    %c0_5 = arith.constant 0 : index
    %15 = vector.load %arg2[%c0_4, %c0_5] : memref<16x8xf32, #tpu.memory_space<vmem>>, vector<16x8xf32>
    %cst = arith.constant 0.000000e+00 : f32
    %16 = vector.shape_cast %13 : vector<16x1xi1> to vector<16x1xi1>
    %17 = vector.broadcast %16 : vector<16x1xi1> to vector<16x8xi1>
    %18 = vector.broadcast %cst : f32 to vector<16x8xf32>
    %19 = arith.select %17, %15, %18 : vector<16x8xi1>, vector<16x8xf32>
    %20 = tpu.iota {dimensions = array<i32: 1>} : vector<16x8xi32>
    %cst_6 = arith.constant dense<0xFF800000> : vector<16xf32>
    %21 = vector.multi_reduction <maximumf>, %19, %cst_6 [1] : vector<16x8xf32> to vector<16xf32>
    %22 = vector.shape_cast %21 : vector<16xf32> to vector<16x1xf32>
    %23 = vector.broadcast %22 : vector<16x1xf32> to vector<16x8xf32>
    %24 = arith.subf %19, %23 : vector<16x8xf32>
    %25 = math.exp %24 : vector<16x8xf32>
    %cst_7 = arith.constant dense<0.000000e+00> : vector<16xf32>
    %26 = vector.multi_reduction <add>, %25, %cst_7 [1] : vector<16x8xf32> to vector<16xf32>
    %27 = vector.shape_cast %26 : vector<16xf32> to vector<16x1xf32>
    %28 = math.log %27 : vector<16x1xf32>
    %29 = arith.addf %22, %28 : vector<16x1xf32>
    %c0_8 = arith.constant 0 : index
    %c0_9 = arith.constant 0 : index
    %30 = vector.load %arg4[%c0_8, %c0_9] : memref<16x1xi32, #tpu.memory_space<vmem>>, vector<16x1xi32>
    %31 = vector.broadcast %30 : vector<16x1xi32> to vector<16x8xi32>
    %32 = arith.cmpi eq, %20, %31 : vector<16x8xi32>
    %cst_10 = arith.constant 0.000000e+00 : f32
    %33 = vector.broadcast %cst_10 : f32 to vector<16x8xf32>
    %34 = arith.select %32, %19, %33 : vector<16x8xi1>, vector<16x8xf32>
    %cst_11 = arith.constant dense<0.000000e+00> : vector<16xf32>
    %35 = vector.multi_reduction <add>, %34, %cst_11 [1] : vector<16x8xf32> to vector<16xf32>
    %36 = vector.shape_cast %35 : vector<16xf32> to vector<16x1xf32>
    %37 = arith.subf %29, %36 : vector<16x1xf32>
    %cst_12 = arith.constant 0.000000e+00 : f32
    %38 = vector.broadcast %cst_12 : f32 to vector<16x1xf32>
    %39 = arith.select %13, %37, %38 : vector<16x1xi1>, vector<16x1xf32>
    %c0_13 = arith.constant 0 : index
    %c0_14 = arith.constant 0 : index
    %40 = vector.load %arg3[%c0_13, %c0_14] : memref<16x8xf32, #tpu.memory_space<vmem>>, vector<16x8xf32>
    %cst_15 = arith.constant 0.000000e+00 : f32
    %41 = vector.shape_cast %13 : vector<16x1xi1> to vector<16x1xi1>
    %42 = vector.broadcast %41 : vector<16x1xi1> to vector<16x8xi1>
    %43 = vector.broadcast %cst_15 : f32 to vector<16x8xf32>
    %44 = arith.select %42, %40, %43 : vector<16x8xi1>, vector<16x8xf32>
    %45 = tpu.iota {dimensions = array<i32: 1>} : vector<16x8xi32>
    %cst_16 = arith.constant dense<0xFF800000> : vector<16xf32>
    %46 = vector.multi_reduction <maximumf>, %44, %cst_16 [1] : vector<16x8xf32> to vector<16xf32>
    %47 = vector.shape_cast %46 : vector<16xf32> to vector<16x1xf32>
    %48 = vector.broadcast %47 : vector<16x1xf32> to vector<16x8xf32>
    %49 = arith.subf %44, %48 : vector<16x8xf32>
    %50 = math.exp %49 : vector<16x8xf32>
    %cst_17 = arith.constant dense<0.000000e+00> : vector<16xf32>
    %51 = vector.multi_reduction <add>, %50, %cst_17 [1] : vector<16x8xf32> to vector<16xf32>
    %52 = vector.shape_cast %51 : vector<16xf32> to vector<16x1xf32>
    %53 = math.log %52 : vector<16x1xf32>
    %54 = arith.addf %47, %53 : vector<16x1xf32>
    %c0_18 = arith.constant 0 : index
    %c0_19 = arith.constant 0 : index
    %55 = vector.load %arg5[%c0_18, %c0_19] : memref<16x1xi32, #tpu.memory_space<vmem>>, vector<16x1xi32>
    %56 = vector.broadcast %55 : vector<16x1xi32> to vector<16x8xi32>
    %57 = arith.cmpi eq, %45, %56 : vector<16x8xi32>
    %cst_20 = arith.constant 0.000000e+00 : f32
    %58 = vector.broadcast %cst_20 : f32 to vector<16x8xf32>
    %59 = arith.select %57, %44, %58 : vector<16x8xi1>, vector<16x8xf32>
    %cst_21 = arith.constant dense<0.000000e+00> : vector<16xf32>
    %60 = vector.multi_reduction <add>, %59, %cst_21 [1] : vector<16x8xf32> to vector<16xf32>
    %61 = vector.shape_cast %60 : vector<16xf32> to vector<16x1xf32>
    %62 = arith.subf %54, %61 : vector<16x1xf32>
    %cst_22 = arith.constant 0.000000e+00 : f32
    %63 = vector.broadcast %cst_22 : f32 to vector<16x1xf32>
    %64 = arith.select %13, %62, %63 : vector<16x1xi1>, vector<16x1xf32>
    %cst_23 = arith.constant 1.000000e-01 : f32
    %65 = vector.broadcast %cst_23 : f32 to vector<16x1xf32>
    %66 = arith.mulf %65, %64 : vector<16x1xf32>
    %67 = arith.addf %39, %66 : vector<16x1xf32>
    %68 = arith.addf %14, %67 : vector<16x1xf32>
    %c0_24 = arith.constant 0 : index
    %c0_25 = arith.constant 0 : index
    %69 = vector.load %arg7[%c0_24, %c0_25] : memref<16x1xf32, #tpu.memory_space<vmem>>, vector<16x1xf32>
    tpu.vector_store %arg7[%c0_24, %c0_25], %68 {strides = array<i32>} : memref<16x1xf32, #tpu.memory_space<vmem>>, vector<16x1xf32>,
    %c0_i32_26 = arith.constant 0 : i32
    %70 = arith.cmpi eq, %arg1, %c0_i32_26 : i32
    %71 = arith.extui %70 : i1 to i32
    %c0_i32_27 = arith.constant 0 : i32
    %72 = arith.cmpi ne, %71, %c0_i32_27 : i32
    scf.if %72 {
      %c0_28 = arith.constant 0 : index
      %c0_29 = arith.constant 0 : index
      %73 = vector.load %arg7[%c0_28, %c0_29] : memref<16x1xf32, #tpu.memory_space<vmem>>, vector<16x1xf32>
      %cst_30 = arith.constant dense<0.000000e+00> : vector<1xf32>
      %74 = vector.multi_reduction <add>, %73, %cst_30 [0] : vector<16x1xf32> to vector<1xf32>
      %75 = vector.shape_cast %74 : vector<1xf32> to vector<1x1xf32>
      %76 = vector.shape_cast %75 : vector<1x1xf32> to vector<1x1x1xf32>
      %77 = vector.shape_cast %76 : vector<1x1x1xf32> to vector<1x1x1xf32>
      %78 = vector.broadcast %77 : vector<1x1x1xf32> to vector<1x8x128xf32>
      %c0_31 = arith.constant 0 : index
      %c0_32 = arith.constant 0 : index
      %c0_33 = arith.constant 0 : index
      %79 = vector.load %arg6[%c0_31, %c0_32, %c0_33] : memref<1x8x128xf32, #tpu.memory_space<vmem>>, vector<1x8x128xf32>
      tpu.vector_store %arg6[%c0_31, %c0_32, %c0_33], %78 {strides = array<i32>} : memref<1x8x128xf32, #tpu.memory_space<vmem>>, vector<1x8x128xf32>,
    } else {
    }
    return
  }
  func.func @transform_0(%arg0: i32, %arg1: i32) -> (i32, i32) {
    %c1_i32 = arith.constant 1 : i32
    %0 = arith.muli %arg0, %c1_i32 : i32
    %1 = arith.addi %0, %arg1 : i32
    %c0_i32 = arith.constant 0 : i32
    %2 = arith.minsi %1, %c0_i32 : i32
    %c0_i32_0 = arith.constant 0 : i32
    %c0_i32_1 = arith.constant 0 : i32
    return %2, %c0_i32_0 : i32, i32
  }
  func.func @transform_1(%arg0: i32, %arg1: i32) -> (i32, i32) {
    %c1_i32 = arith.constant 1 : i32
    %0 = arith.muli %arg0, %c1_i32 : i32
    %1 = arith.addi %0, %arg1 : i32
    %c0_i32 = arith.constant 0 : i32
    %2 = arith.minsi %1, %c0_i32 : i32
    %c0_i32_0 = arith.constant 0 : i32
    %c0_i32_1 = arith.constant 0 : i32
    return %2, %c0_i32_0 : i32, i32
  }
  func.func @transform_2(%arg0: i32, %arg1: i32) -> (i32, i32) {
    %c1_i32 = arith.constant 1 : i32
    %0 = arith.muli %arg0, %c1_i32 : i32
    %1 = arith.addi %0, %arg1 : i32
    %c0_i32 = arith.constant 0 : i32
    %2 = arith.minsi %1, %c0_i32 : i32
    %c0_i32_0 = arith.constant 0 : i32
    %c0_i32_1 = arith.constant 0 : i32
    return %2, %c0_i32_0 : i32, i32
  }
  func.func @transform_3(%arg0: i32, %arg1: i32) -> (i32, i32) {
    %c1_i32 = arith.constant 1 : i32
    %0 = arith.muli %arg0, %c1_i32 : i32
    %1 = arith.addi %0, %arg1 : i32
    %c0_i32 = arith.constant 0 : i32
    %2 = arith.minsi %1, %c0_i32 : i32
    %c0_i32_0 = arith.constant 0 : i32
    %c0_i32_1 = arith.constant 0 : i32
    return %2, %c0_i32_0 : i32, i32
  }
  func.func @transform_4(%arg0: i32, %arg1: i32) -> (i32, i32, i32) {
    %c0_i32 = arith.constant 0 : i32
    %c0_i32_0 = arith.constant 0 : i32
    %c0_i32_1 = arith.constant 0 : i32
    return %arg0, %c0_i32, %c0_i32_0 : i32, i32, i32
  }
}

</mosaic_0001>

<llo_original>
// kernel: ctloss_pallas.1
$region0: #{ctloss_pallas.1}
  #allocation0 [shape = 'u32[]', space=smem, size = 0x4, offset = 0x4, fixed_abs, tag = 'smem constant byte address 0x4 - core index']
  #allocation1 [shape = 'u32[144,128]{1,0:T(1,128)}', space=vmem, size = 0x12000, scoped, tag = 'internal scratch']
  #allocation2 [shape = 'f32[16,1]{1,0:T(8,128)}', space=vmem, size = 0x2000, scoped, tag = 'scratch operand']
  %s0 = inlined_call_operand.vmem [shape: f32[16,8], index: 0, kind: input, shape index: {}]
  %s1 = inlined_call_operand.vmem [shape: f32[16,8], index: 1, kind: input, shape index: {}]
  %s2 = inlined_call_operand.vmem [shape: s32[16,1], index: 2, kind: input, shape index: {}]
  %s3 = inlined_call_operand.vmem [shape: s32[16,1], index: 3, kind: input, shape index: {}]
  %s4 = inlined_call_operand.vmem [shape: f32[1,8,128], index: 4, kind: output, shape index: {}]
  %s5 = sld [smem:[#allocation0]]
  $region34: #{ctloss_pallas.1} parent=0
    _
  %s7 = ssub.s32 1, %s5
  %s8 = scalar_select 0, %s7, %s5
  // Predicated region
  $region2: #{ctloss_pallas.1} parent=0 // pred_check
    _
  $region3: #{ctloss_pallas.1} parent=0 // pred_check_branch
    %10 = sbr.rel (0) target = $region5
  $region4: #{ctloss_pallas.1} parent=0 // pred_region
    %s11 = sadd.s32 0, 0
    %p12 = scmp.lt.s32.totalorder %s11, 0
    %s13 = scalar_select %p12, %s11, 0
    %s14 = smul.u32 2, %s13
    %p15 = scmp.lt.s32.totalorder %s14, 1
    %s16 = scalar_select %p15, %s14, 1
    %s17 = smul.addr %s16, 8
    %s18 = scalar_lea.vmem %s0, %s17
    %s19 = sadd.s32 0, 0
    %p20 = scmp.lt.s32.totalorder %s19, 0
    %s21 = scalar_select %p20, %s19, 0
    %s22 = smul.u32 2, %s21
  $region5: #{ctloss_pallas.1} parent=0 // pred_fallthru
    _
  // Predicated region
  $region6: #{ctloss_pallas.1} parent=0 // pred_check
    _
  $region7: #{ctloss_pallas.1} parent=0 // pred_check_branch
    %24 = sbr.rel (0) target = $region9
  $region8: #{ctloss_pallas.1} parent=0 // pred_region
    %s25 = sadd.s32 0, 0
    %p26 = scmp.lt.s32.totalorder %s25, 0
    %s27 = scalar_select %p26, %s25, 0
    %s28 = smul.u32 2, %s27
    %p29 = scmp.lt.s32.totalorder %s28, 1
    %s30 = scalar_select %p29, %s28, 1
    %s31 = smul.addr %s30, 8
    %s32 = scalar_lea.vmem %s1, %s31
    %s33 = sadd.s32 0, 0
    %p34 = scmp.lt.s32.totalorder %s33, 0
    %s35 = scalar_select %p34, %s33, 0
    %s36 = smul.u32 2, %s35
  $region9: #{ctloss_pallas.1} parent=0 // pred_fallthru
    _
  // Predicated region
  $region10: #{ctloss_pallas.1} parent=0 // pred_check
    _
  $region11: #{ctloss_pallas.1} parent=0 // pred_check_branch
    %38 = sbr.rel (0) target = $region13
  $region12: #{ctloss_pallas.1} parent=0 // pred_region
    %s39 = sadd.s32 0, 0
    %p40 = scmp.lt.s32.totalorder %s39, 0
    %s41 = scalar_select %p40, %s39, 0
    %s42 = smul.u32 2, %s41
    %p43 = scmp.lt.s32.totalorder %s42, 1
    %s44 = scalar_select %p43, %s42, 1
    %s45 = smul.addr %s44, 8
    %s46 = scalar_lea.vmem %s2, %s45
    %s47 = sadd.s32 0, 0
    %p48 = scmp.lt.s32.totalorder %s47, 0
    %s49 = scalar_select %p48, %s47, 0
    %s50 = smul.u32 2, %s49
  $region13: #{ctloss_pallas.1} parent=0 // pred_fallthru
    _
  // Predicated region
  $region14: #{ctloss_pallas.1} parent=0 // pred_check
    _
  $region15: #{ctloss_pallas.1} parent=0 // pred_check_branch
    %52 = sbr.rel (0) target = $region17
  $region16: #{ctloss_pallas.1} parent=0 // pred_region
    %s53 = sadd.s32 0, 0
    %p54 = scmp.lt.s32.totalorder %s53, 0
    %s55 = scalar_select %p54, %s53, 0
    %s56 = smul.u32 2, %s55
    %p57 = scmp.lt.s32.totalorder %s56, 1
    %s58 = scalar_select %p57, %s56, 1
    %s59 = smul.addr %s58, 8
    %s60 = scalar_lea.vmem %s3, %s59
    %s61 = sadd.s32 0, 0
    %p62 = scmp.lt.s32.totalorder %s61, 0
    %s63 = scalar_select %p62, %s61, 0
    %s64 = smul.u32 2, %s63
  $region17: #{ctloss_pallas.1} parent=0 // pred_fallthru
    _
  %s65 = sadd.s32 0, 0
  %p66 = scmp.lt.s32.totalorder %s65, 0
  %s67 = scalar_select %p66, %s65, 0
  %s68 = smul.u32 2, %s67
  %p69 = scmp.lt.s32.totalorder %s68, 1
  %s70 = scalar_select %p69, %s68, 1
  %s71 = smul.addr %s70, 8
  %s72 = scalar_lea.vmem %s0, %s71
  %s73 = sadd.s32 0, 0
  %p74 = scmp.lt.s32.totalorder %s73, 0
  %s75 = scalar_select %p74, %s73, 0
  %s76 = smul.u32 2, %s75
  %p77 = scmp.lt.s32.totalorder %s76, 1
  %s78 = scalar_select %p77, %s76, 1
  %s79 = smul.addr %s78, 8
  %s80 = scalar_lea.vmem %s1, %s79
  %s81 = sadd.s32 0, 0
  %p82 = scmp.lt.s32.totalorder %s81, 0
  %s83 = scalar_select %p82, %s81, 0
  %s84 = smul.u32 2, %s83
  %p85 = scmp.lt.s32.totalorder %s84, 1
  %s86 = scalar_select %p85, %s84, 1
  %s87 = smul.addr %s86, 8
  %s88 = scalar_lea.vmem %s2, %s87
  %s89 = sadd.s32 0, 0
  %p90 = scmp.lt.s32.totalorder %s89, 0
  %s91 = scalar_select %p90, %s89, 0
  %s92 = smul.u32 2, %s91
  %p93 = scmp.lt.s32.totalorder %s92, 1
  %s94 = scalar_select %p93, %s92, 1
  %s95 = smul.addr %s94, 8
  %s96 = scalar_lea.vmem %s3, %s95
  %s97 = sadd.s32 0, 0
  %p98 = scmp.lt.s32.totalorder %s97, 0
  %s99 = scalar_select %p98, %s97, 0
  %s100 = smul.u32 2, %s99
  %p101 = scmp.lt.s32.totalorder %s100, 1
  %s102 = scalar_select %p101, %s100, 1
  %s103 = smul.addr %s102, 8
  %s104 = scalar_lea.vmem %s0, %s103
  %s105 = sadd.s32 0, 0
  %p106 = scmp.lt.s32.totalorder %s105, 0
  %s107 = scalar_select %p106, %s105, 0
  %s108 = smul.u32 2, %s107
  %s109 = sadd.s32 0, 0
  %p110 = scmp.lt.s32.totalorder %s109, 0
  %s111 = scalar_select %p110, %s109, 0
  %s112 = smul.u32 2, %s111
  %p113 = scmp.lt.s32.totalorder %s112, 1
  %s114 = scalar_select %p113, %s112, 1
  %s115 = smul.addr %s114, 8
  %s116 = scalar_lea.vmem %s1, %s115
  %s117 = sadd.s32 0, 0
  %p118 = scmp.lt.s32.totalorder %s117, 0
  %s119 = scalar_select %p118, %s117, 0
  %s120 = smul.u32 2, %s119
  %s121 = sadd.s32 0, 0
  %p122 = scmp.lt.s32.totalorder %s121, 0
  %s123 = scalar_select %p122, %s121, 0
  %s124 = smul.u32 2, %s123
  %p125 = scmp.lt.s32.totalorder %s124, 1
  %s126 = scalar_select %p125, %s124, 1
  %s127 = smul.addr %s126, 8
  %s128 = scalar_lea.vmem %s2, %s127
  %s129 = sadd.s32 0, 0
  %p130 = scmp.lt.s32.totalorder %s129, 0
  %s131 = scalar_select %p130, %s129, 0
  %s132 = smul.u32 2, %s131
  %s133 = sadd.s32 0, 0
  %p134 = scmp.lt.s32.totalorder %s133, 0
  %s135 = scalar_select %p134, %s133, 0
  %s136 = smul.u32 2, %s135
  %p137 = scmp.lt.s32.totalorder %s136, 1
  %s138 = scalar_select %p137, %s136, 1
  %s139 = smul.addr %s138, 8
  %s140 = scalar_lea.vmem %s3, %s139
  %s141 = sadd.s32 0, 0
  %p142 = scmp.lt.s32.totalorder %s141, 0
  %s143 = scalar_select %p142, %s141, 0
  %s144 = smul.u32 2, %s143
  %s145 = sadd.s32 0, 0
  %p146 = scmp.eq.s32.totalorder 0, 0
  // Predicated region
  $region18: #{ctloss_pallas.1} parent=0 // pred_check
    %p147 = pneg %p146
  $region19: #{ctloss_pallas.1} parent=0 // pred_check_branch
    %149 = sbr.rel (%p147) target = $region21
  $region20: #{ctloss_pallas.1} parent=0 // pred_region
    %vm150 = vcmask 7168
    %151 = vst.msk [vmem:[#allocation2] sm:$0xff] %vm150, 0.0
    %152 = vst.msk [vmem:[#allocation2 + $0x8] sm:$0xff] %vm150, 0.0
  $region21: #{ctloss_pallas.1} parent=0 // pred_fallthru
    _
  %v153 = vlaneseq
  %v154 = vshrl.u32 %v153, 7
  %v155 = vadd.s32 %v154, 8
  %s156 = smul.u32 %s145, 16
  %v157 = vstv %s156
  %v158 = vadd.s32 %v154, %v157
  %v159 = vadd.s32 %v155, %v157
  %vm160 = vcmp.lt.s32.totalorder %v158, 16
  %vm161 = vcmp.lt.s32.totalorder %v159, 16
  %p162 = scmp.lt.s32.totalorder %s145, 1
  %s163 = scalar_select %p162, 1, 0
  %v164 = vstv %s163
  %vm165 = vcmp.eq.s32.totalorder %v164, 1
  %vm166 = vmand %vm160, %vm165
  %vm167 = vmand %vm161, %vm165
  %v168 = vld [vmem:[#allocation2] sm:$0xff]
  %v169 = vld [vmem:[#allocation2 + $0x8] sm:$0xff]
  %v170 = vld [vmem:[%s104] sm:$0xff]
  %v171 = vld [vmem:[%s104 + $0x8] sm:$0xff]
  %v172 = vsel %vm166, 1, 0
  %v173 = vsel %vm167, 1, 0
  %vm174 = vcmp.eq.s32.totalorder %v172, 1
  %vm175 = vcmp.eq.s32.totalorder %v173, 1
  %v176 = vsel %vm174, %v170, 0.0
  %v177 = vsel %vm175, %v171, 0.0
  %v178 = vlaneseq
  %v179 = vand.u32 %v178, 127
  %vm180 = vcmask 64512
  %v181 = vsel %vm180, %v176, -inf
  %182 = vmax.xlane.f32.xlu0 %v181
  %v183 = vpop.xlane.xlu0 %182
  %v184 = vsel %vm180, %v177, -inf
  %185 = vmax.xlane.f32.xlu0 %v184
  %v186 = vpop.xlane.xlu0 %185
  %v187 = vsub.f32 %v176, %v183
  %v188 = vsub.f32 %v177, %v186
  %v189 = vmul.f32 %v187, 1.442695
  %v190 = vpow.pop %v189
  %v191 = vmul.f32 %v188, 1.442695
  %v192 = vpow.pop %v191
  %v193 = vsel %vm180, %v190, 0.0
  %194 = vadd.xlane.f32.xlu0 %v193
  %v195 = vpop.xlane.xlu0 %194
  %v196 = vsel %vm180, %v192, 0.0
  %197 = vadd.xlane.f32.xlu0 %v196
  %v198 = vpop.xlane.xlu0 %197
  %v199 = vlog2.pop %v195
  %v200 = vmul.f32 %v199, 0.6931472
  %v201 = vlog2.pop %v198
  %v202 = vmul.f32 %v201, 0.6931472
  %v203 = vadd.f32 %v183, %v200
  %v204 = vadd.f32 %v186, %v202
  %v205 = vld [vmem:[%s128] sm:$0xff]
  %v206 = vld [vmem:[%s128 + $0x8] sm:$0xff]
  %207 = vset.pattern.permute.xlu0 0
  %208 = vperm.xlu0 %207, %v205
  %v209 = vpop.permute.xlu0 %208
  %210 = vset.pattern.permute.xlu0 0
  %211 = vperm.xlu0 %210, %v206
  %v212 = vpop.permute.xlu0 %211
  %vm213 = vcmp.eq.s32.totalorder %v179, %v209
  %vm214 = vcmp.eq.s32.totalorder %v179, %v212
  %v215 = vsel %vm213, %v176, 0.0
  %v216 = vsel %vm214, %v177, 0.0
  %v217 = vsel %vm180, %v215, 0.0
  %218 = vadd.xlane.f32.xlu0 %v217
  %v219 = vpop.xlane.xlu0 %218
  %v220 = vsel %vm180, %v216, 0.0
  %221 = vadd.xlane.f32.xlu0 %v220
  %v222 = vpop.xlane.xlu0 %221
  %v223 = vsub.f32 %v203, %v219
  %v224 = vsub.f32 %v204, %v222
  %v225 = vsel %vm166, %v223, 0.0
  %v226 = vsel %vm167, %v224, 0.0
  %v227 = vld [vmem:[%s116] sm:$0xff]
  %v228 = vld [vmem:[%s116 + $0x8] sm:$0xff]
  %v229 = vsel %vm174, %v227, 0.0
  %v230 = vsel %vm175, %v228, 0.0
  %v231 = vsel %vm180, %v229, -inf
  %232 = vmax.xlane.f32.xlu0 %v231
  %v233 = vpop.xlane.xlu0 %232
  %v234 = vsel %vm180, %v230, -inf
  %235 = vmax.xlane.f32.xlu0 %v234
  %v236 = vpop.xlane.xlu0 %235
  %v237 = vsub.f32 %v229, %v233
  %v238 = vsub.f32 %v230, %v236
  %v239 = vmul.f32 %v237, 1.442695
  %v240 = vpow.pop %v239
  %v241 = vmul.f32 %v238, 1.442695
  %v242 = vpow.pop %v241
  %v243 = vsel %vm180, %v240, 0.0
  %244 = vadd.xlane.f32.xlu0 %v243
  %v245 = vpop.xlane.xlu0 %244
  %v246 = vsel %vm180, %v242, 0.0
  %247 = vadd.xlane.f32.xlu0 %v246
  %v248 = vpop.xlane.xlu0 %247
  %v249 = vlog2.pop %v245
  %v250 = vmul.f32 %v249, 0.6931472
  %v251 = vlog2.pop %v248
  %v252 = vmul.f32 %v251, 0.6931472
  %v253 = vadd.f32 %v233, %v250
  %v254 = vadd.f32 %v236, %v252
  %v255 = vld [vmem:[%s140] sm:$0xff]
  %v256 = vld [vmem:[%s140 + $0x8] sm:$0xff]
  %257 = vset.pattern.permute.xlu0 0
  %258 = vperm.xlu0 %257, %v255
  %v259 = vpop.permute.xlu0 %258
  %260 = vset.pattern.permute.xlu0 0
  %261 = vperm.xlu0 %260, %v256
  %v262 = vpop.permute.xlu0 %261
  %vm263 = vcmp.eq.s32.totalorder %v179, %v259
  %vm264 = vcmp.eq.s32.totalorder %v179, %v262
  %v265 = vsel %vm263, %v229, 0.0
  %v266 = vsel %vm264, %v230, 0.0
  %v267 = vsel %vm180, %v265, 0.0
  %268 = vadd.xlane.f32.xlu0 %v267
  %v269 = vpop.xlane.xlu0 %268
  %v270 = vsel %vm180, %v266, 0.0
  %271 = vadd.xlane.f32.xlu0 %v270
  %v272 = vpop.xlane.xlu0 %271
  %v273 = vsub.f32 %v253, %v269
  %v274 = vsub.f32 %v254, %v272
  %v275 = vsel %vm166, %v273, 0.0
  %v276 = vsel %vm167, %v274, 0.0
  %v277 = vmul.f32 %v275, 0.1
  %v278 = vmul.f32 %v276, 0.1
  %v279 = vadd.f32 %v225, %v277
  %v280 = vadd.f32 %v226, %v278
  %v281 = vadd.f32 %v168, %v279
  %v282 = vadd.f32 %v169, %v280
  %vm283 = vcmask 7168
  %284 = vst.msk [vmem:[#allocation2] sm:$0xff] %vm283, %v281
  %285 = vst.msk [vmem:[#allocation2 + $0x8] sm:$0xff] %vm283, %v282
  // Predicated region
  $region22: #{ctloss_pallas.1} parent=0 // pred_check
    %p286 = pneg %p146
  $region23: #{ctloss_pallas.1} parent=0 // pred_check_branch
    %288 = sbr.rel (%p286) target = $region25
  $region24: #{ctloss_pallas.1} parent=0 // pred_region
    %v289 = vld [vmem:[#allocation2] sm:$0xff]
    %v290 = vld [vmem:[#allocation2 + $0x8] sm:$0xff]
    %v291 = vsel %vm283, %v289, 0.0
    %v292 = vsel %vm283, %v290, 0.0
    %v293 = vadd.f32 %v291, %v292
    %v294 = vrot.slane %v293, 4
    %v295 = vadd.f32 %v293, %v294
    %v296 = vrot.slane %v295, 2
    %v297 = vadd.f32 %v295, %v296
    %v298 = vrot.slane %v297, 1
    %v299 = vadd.f32 %v297, %v298
    %301 = vset.pattern.permute.xlu0 0
    %302 = vperm.xlu0 %301, %v299
    %v303 = vpop.permute.xlu0 %302
    %305 = vst [vmem:[%s4] sm:$0xff] %v303
  $region25: #{ctloss_pallas.1} parent=0 // pred_fallthru
    _
  // Predicated region
  $region26: #{ctloss_pallas.1} parent=0 // pred_check
    _
  $region27: #{ctloss_pallas.1} parent=0 // pred_check_branch
    %307 = sbr.rel (0) target = $region29
  $region28: #{ctloss_pallas.1} parent=0 // pred_region
    _
  $region29: #{ctloss_pallas.1} parent=0 // pred_fallthru
    _
  // Predicated region
  $region30: #{ctloss_pallas.1} parent=0 // pred_check
    _
  $region31: #{ctloss_pallas.1} parent=0 // pred_check_branch
    %309 = sbr.rel (0) target = $region33
  $region32: #{ctloss_pallas.1} parent=0 // pred_region
    _
  $region33: #{ctloss_pallas.1} parent=0 // pred_fallthru
    _

</llo_original>
